<compile_context>
chip_gen: v7x
topology: tpu7x:2x2x1
jax: 0.10.0
libtpu: 0.0.40
codegen_flags: <defaults>
</compile_context>

<pallas_src>
import functools

import jax
import jax.numpy as jnp
from jax.experimental import pallas as pl
from jax.experimental.pallas import tpu as pltpu


# Lane-dense last dim (multiple of 128 -> unmasked stores); row tile multiple
# of 32 (uint8 sublane tile).  512x512 u8 = 256 KiB per buffer.
_LANES = 512
_TILE_R = 512

# Irwin-Hall with 12 x Uniform{0..255}/256:
#   mean = 12 * 255 / (2 * 256) = 5.9765625, variance ~= 1.0 (0.99998).
_IH_MEAN = 12.0 * 255.0 / (2.0 * 256.0)


def _round_up(x, m):
    return ((x + m - 1) // m) * m


def _fmix32(x):
    """Murmur3 32-bit finalizer (good avalanche, plain VPU int ops)."""
    x = x ^ (x >> 16)
    x = x * jnp.uint32(0x85EBCA6B)
    x = x ^ (x >> 13)
    x = x * jnp.uint32(0xC2B2AE35)
    x = x ^ (x >> 16)
    return x


def _noise_deg_kernel(seed_ref, scale_ref, img_ref, out_ref):
    """Additive Gaussian-ish noise + clip(0, 255) + truncating uint8 cast.

    seed_ref : SMEM (1,) int32    -- PRNG seed
    scale_ref: SMEM (2,) float32  -- [sigma / 256, sigma * IH_MEAN]
    img_ref  : VMEM (TILE_R, LANES) uint8 -- clean image tile
    out_ref  : VMEM (TILE_R, LANES) uint8 -- degraded tile
    """
    tile_r, lanes = out_ref.shape
    seed = seed_ref[0].astype(jnp.uint32)
    a = scale_ref[0]   # sigma / 256
    b = scale_ref[1]   # sigma * IH_MEAN

    # Global element index -> counter-based PRNG (deterministic, tile-safe).
    block_off = pl.program_id(0) * (tile_r * lanes)
    row = jax.lax.broadcasted_iota(jnp.int32, (tile_r, lanes), 0)
    col = jax.lax.broadcasted_iota(jnp.int32, (tile_r, lanes), 1)
    idx = (block_off + row * lanes + col).astype(jnp.uint32)

    # 3 hash words -> 12 x 8-bit uniforms.  SWAR byte sum: bytes {0,2} and
    # {1,3} of each word land in the two 16-bit halves of pair_acc
    # (max 6*255 = 1530 per half, no cross-half carry), then one fold.
    mask = jnp.uint32(0x00FF00FF)
    pair_acc = jnp.zeros((tile_r, lanes), jnp.uint32)
    for r in range(3):
        c = jnp.uint32((r * 0x9E3779B9 + 0x6A09E667) & 0xFFFFFFFF)
        w = _fmix32(idx ^ (seed + c))
        pair_acc = pair_acc + (w & mask) + ((w >> 8) & mask)
    bsum = ((pair_acc & jnp.uint32(0xFFFF)) + (pair_acc >> 16)).astype(jnp.int32)

    # sigma * N(0, 1) approx  ==  bsum * (sigma/256) - sigma*IH_MEAN.
    noise_scaled = bsum.astype(jnp.float32) * a - b

    noisy = img_ref[...].astype(jnp.float32) + noise_scaled
    # np.uint8(clip(x, 0, 255)): clip then truncating cast (values >= 0).
    out_ref[...] = jnp.clip(noisy, 0.0, 255.0).astype(jnp.uint8)


@functools.partial(jax.jit, static_argnames=("block_rows",))
def _run_noise_kernel(img2d, seed, scale, block_rows):
    rows, lanes = img2d.shape
    grid = (rows // block_rows,)
    return pl.pallas_call(
        _noise_deg_kernel,
        out_shape=jax.ShapeDtypeStruct((rows, lanes), jnp.uint8),
        grid=grid,
        in_specs=[
            pl.BlockSpec(memory_space=pltpu.MemorySpace.SMEM),
            pl.BlockSpec(memory_space=pltpu.MemorySpace.SMEM),
            pl.BlockSpec((block_rows, lanes), lambda i: (i, 0)),
        ],
        out_specs=pl.BlockSpec((block_rows, lanes), lambda i: (i, 0)),
        compiler_params=pltpu.CompilerParams(
            dimension_semantics=("parallel",)),
    )(seed, scale, img2d)


def _flatten_pad(img, lanes, tile_r):
    """Flatten to a lane-dense (rows, lanes) uint8 slab, padding the tail."""
    total = img.size
    flat = img.reshape(-1)
    rows = -(-total // lanes)
    block_rows = min(tile_r, _round_up(rows, 32))   # 32 = uint8 sublane tile
    rows_padded = _round_up(rows, block_rows)
    padded = rows_padded * lanes
    if padded != total:
        flat = jnp.pad(flat, (0, padded - total))
    return flat.reshape(rows_padded, lanes), block_rows, total


def deg_apply_with_level(img, key, deg_type="noise", deg_range=(0, 50),
                         deg_list=None):
    """JAX/Pallas equivalent of DegApplyWithLevel.forward for deg_type='noise'.

    Args:
      img: uint8 NCHW (or any-shaped) image with values in [0, 255].
      key: jax.random.PRNGKey (replaces the module's host `random`).
      deg_type: only 'noise' is supported by the kernel.
      deg_range / deg_list: exactly one must be provided (as in the module).
    Returns:
      (deg_img uint8, same shape as img; deg_lev float32 scalar)
    """
    if deg_type != "noise":
        # TODO(synk): 'jpeg'/'blur'/'saltpepper' have no clean Pallas equivalent here.
        raise NotImplementedError("Only 'noise' is implemented as a Pallas kernel.")
    if deg_range is None and deg_list is None:
        raise TypeError("Both deg_range and deg_list do not have values.")
    if deg_range is not None and deg_list is not None:
        raise TypeError("deg_range or deg_list have values.")

    k_lev, k_seed = jax.random.split(key)
    if deg_range is not None:
        deg_lev = jax.random.randint(
            k_lev, (), deg_range[0], deg_range[1] + 1).astype(jnp.float32)
    else:
        idx = jax.random.randint(k_lev, (), 0, len(deg_list))
        deg_lev = jnp.asarray(deg_list, jnp.float32)[idx]
    deg_adj = 1.0  # degradation_function('noise') -> adj = 1.0
    if deg_adj > 1.0:
        deg_lev = deg_lev / deg_adj

    seed = jax.random.randint(k_seed, (1,), 0, 2**31 - 1, dtype=jnp.int32)
    # Fold Irwin-Hall centering/scaling into two scalars (SMEM).
    scale = jnp.stack([deg_lev * jnp.float32(1.0 / 256.0),
                       deg_lev * jnp.float32(_IH_MEAN)]).astype(jnp.float32)

    orig_shape = img.shape
    img2d, block_rows, total = _flatten_pad(img, _LANES, _TILE_R)

    out2d = _run_noise_kernel(img2d, seed, scale, block_rows)
    deg_img = out2d.reshape(-1)[:total].reshape(orig_shape)
    return deg_img, deg_lev


if __name__ == "__main__":
    key = jax.random.PRNGKey(0)
    k_img, k_deg, k_deg0, k_deg30 = jax.random.split(key, 4)

    # Synthetic "clean image": NCHW uint8 (PIL -> np.array semantics).
    x = jax.random.randint(k_img, (2, 4, 16, 16), 0, 256,
                           dtype=jnp.int32).astype(jnp.uint8)

    # Main run: random level in [0, 50].
    deg_img, deg_lev = deg_apply_with_level(
        x, k_deg, deg_type="noise", deg_range=(0, 50), deg_list=None)
    jax.block_until_ready(deg_img)
    jax.block_until_ready(deg_lev)
    assert deg_img.shape == x.shape
    assert deg_img.dtype == jnp.uint8
    assert 0.0 <= float(deg_lev) <= 50.0

    # sigma = 0 -> kernel must reproduce the clean image exactly.
    clean_img, lev0 = deg_apply_with_level(
        x, k_deg0, deg_type="noise", deg_range=(0, 0), deg_list=None)
    jax.block_until_ready(clean_img)
    assert float(lev0) == 0.0
    assert bool(jnp.all(clean_img == x))

    # Fixed sigma = 30 on mid-gray: empirical noise stats should be sane.
    gray = jnp.full((2, 4, 16, 16), 128, jnp.uint8)
    noisy_img, lev30 = deg_apply_with_level(
        gray, k_deg30, deg_type="noise", deg_range=None, deg_list=[30])
    jax.block_until_ready(noisy_img)
    diff = noisy_img.astype(jnp.float32) - 128.0
    assert abs(float(jnp.std(diff)) - 30.0) < 6.0
    assert abs(float(jnp.mean(diff))) < 3.0

    print("KERNEL_OK")
</pallas_src>

<mosaic_0001>
module attributes {stable_mosaic.version = 11 : i64} {
  func.func @_noise_deg_kernel(%arg0: i32, %arg1: memref<1xi32, #tpu.memory_space<smem>>, %arg2: memref<2xf32, #tpu.memory_space<smem>>, %arg3: memref<32x512xi8, #tpu.memory_space<vmem>>, %arg4: memref<32x512xi8, #tpu.memory_space<vmem>>) attributes {dimension_semantics = [#tpu.dimension_semantics<parallel>], iteration_bounds = array<i64: 1>, scalar_prefetch = 0 : i64, scratch_operands = 0 : i64, tpu.core_type = #tpu.core_type<tc>, window_params = [{transform_indices = @transform_0, window_bounds = array<i64: 1>}, {transform_indices = @transform_1, window_bounds = array<i64: 2>}, {transform_indices = @transform_2, window_bounds = array<i64: 32, 512>}, {transform_indices = @transform_3, window_bounds = array<i64: 32, 512>}]} {
    %c0 = arith.constant 0 : index
    %0 = memref.load %arg1[%c0] : memref<1xi32, #tpu.memory_space<smem>>
    %c0_0 = arith.constant 0 : index
    %1 = memref.load %arg2[%c0_0] : memref<2xf32, #tpu.memory_space<smem>>
    %c1 = arith.constant 1 : index
    %2 = memref.load %arg2[%c1] : memref<2xf32, #tpu.memory_space<smem>>
    %c16384_i32 = arith.constant 16384 : i32
    %3 = arith.muli %arg0, %c16384_i32 : i32
    %4 = tpu.iota {dimensions = array<i32: 0>} : vector<32x512xi32>
    %5 = tpu.iota {dimensions = array<i32: 1>} : vector<32x512xi32>
    %c512_i32 = arith.constant 512 : i32
    %6 = vector.broadcast %c512_i32 : i32 to vector<32x512xi32>
    %7 = arith.muli %4, %6 : vector<32x512xi32>
    %8 = vector.broadcast %3 : i32 to vector<32x512xi32>
    %9 = arith.addi %8, %7 : vector<32x512xi32>
    %10 = arith.addi %9, %5 : vector<32x512xi32>
    %c0_i32 = arith.constant 0 : i32
    %11 = vector.broadcast %c0_i32 : i32 to vector<32x512xi32>
    %c1779033703_i32 = arith.constant 1779033703 : i32
    %12 = arith.addi %0, %c1779033703_i32 : i32
    %13 = vector.broadcast %12 : i32 to vector<32x512xi32>
    %14 = arith.xori %10, %13 : vector<32x512xi32>
    %c16_i32 = arith.constant 16 : i32
    %15 = vector.broadcast %c16_i32 : i32 to vector<32x512xi32>
    %16 = arith.shrui %14, %15 : vector<32x512xi32>
    %17 = arith.xori %14, %16 : vector<32x512xi32>
    %c-2048144789_i32 = arith.constant -2048144789 : i32
    %18 = vector.broadcast %c-2048144789_i32 : i32 to vector<32x512xi32>
    %19 = arith.muli %17, %18 : vector<32x512xi32>
    %c13_i32 = arith.constant 13 : i32
    %20 = vector.broadcast %c13_i32 : i32 to vector<32x512xi32>
    %21 = arith.shrui %19, %20 : vector<32x512xi32>
    %22 = arith.xori %19, %21 : vector<32x512xi32>
    %c-1028477387_i32 = arith.constant -1028477387 : i32
    %23 = vector.broadcast %c-1028477387_i32 : i32 to vector<32x512xi32>
    %24 = arith.muli %22, %23 : vector<32x512xi32>
    %c16_i32_1 = arith.constant 16 : i32
    %25 = vector.broadcast %c16_i32_1 : i32 to vector<32x512xi32>
    %26 = arith.shrui %24, %25 : vector<32x512xi32>
    %27 = arith.xori %24, %26 : vector<32x512xi32>
    %c16711935_i32 = arith.constant 16711935 : i32
    %28 = vector.broadcast %c16711935_i32 : i32 to vector<32x512xi32>
    %29 = arith.andi %27, %28 : vector<32x512xi32>
    %30 = arith.addi %11, %29 : vector<32x512xi32>
    %c8_i32 = arith.constant 8 : i32
    %31 = vector.broadcast %c8_i32 : i32 to vector<32x512xi32>
    %32 = arith.shrui %27, %31 : vector<32x512xi32>
    %c16711935_i32_2 = arith.constant 16711935 : i32
    %33 = vector.broadcast %c16711935_i32_2 : i32 to vector<32x512xi32>
    %34 = arith.andi %32, %33 : vector<32x512xi32>
    %35 = arith.addi %30, %34 : vector<32x512xi32>
    %c138502176_i32 = arith.constant 138502176 : i32
    %36 = arith.addi %0, %c138502176_i32 : i32
    %37 = vector.broadcast %36 : i32 to vector<32x512xi32>
    %38 = arith.xori %10, %37 : vector<32x512xi32>
    %c16_i32_3 = arith.constant 16 : i32
    %39 = vector.broadcast %c16_i32_3 : i32 to vector<32x512xi32>
    %40 = arith.shrui %38, %39 : vector<32x512xi32>
    %41 = arith.xori %38, %40 : vector<32x512xi32>
    %c-2048144789_i32_4 = arith.constant -2048144789 : i32
    %42 = vector.broadcast %c-2048144789_i32_4 : i32 to vector<32x512xi32>
    %43 = arith.muli %41, %42 : vector<32x512xi32>
    %c13_i32_5 = arith.constant 13 : i32
    %44 = vector.broadcast %c13_i32_5 : i32 to vector<32x512xi32>
    %45 = arith.shrui %43, %44 : vector<32x512xi32>
    %46 = arith.xori %43, %45 : vector<32x512xi32>
    %c-1028477387_i32_6 = arith.constant -1028477387 : i32
    %47 = vector.broadcast %c-1028477387_i32_6 : i32 to vector<32x512xi32>
    %48 = arith.muli %46, %47 : vector<32x512xi32>
    %c16_i32_7 = arith.constant 16 : i32
    %49 = vector.broadcast %c16_i32_7 : i32 to vector<32x512xi32>
    %50 = arith.shrui %48, %49 : vector<32x512xi32>
    %51 = arith.xori %48, %50 : vector<32x512xi32>
    %c16711935_i32_8 = arith.constant 16711935 : i32
    %52 = vector.broadcast %c16711935_i32_8 : i32 to vector<32x512xi32>
    %53 = arith.andi %51, %52 : vector<32x512xi32>
    %54 = arith.addi %35, %53 : vector<32x512xi32>
    %c8_i32_9 = arith.constant 8 : i32
    %55 = vector.broadcast %c8_i32_9 : i32 to vector<32x512xi32>
    %56 = arith.shrui %51, %55 : vector<32x512xi32>
    %c16711935_i32_10 = arith.constant 16711935 : i32
    %57 = vector.broadcast %c16711935_i32_10 : i32 to vector<32x512xi32>
    %58 = arith.andi %56, %57 : vector<32x512xi32>
    %59 = arith.addi %54, %58 : vector<32x512xi32>
    %c-1502029351_i32 = arith.constant -1502029351 : i32
    %60 = arith.addi %0, %c-1502029351_i32 : i32
    %61 = vector.broadcast %60 : i32 to vector<32x512xi32>
    %62 = arith.xori %10, %61 : vector<32x512xi32>
    %c16_i32_11 = arith.constant 16 : i32
    %63 = vector.broadcast %c16_i32_11 : i32 to vector<32x512xi32>
    %64 = arith.shrui %62, %63 : vector<32x512xi32>
    %65 = arith.xori %62, %64 : vector<32x512xi32>
    %c-2048144789_i32_12 = arith.constant -2048144789 : i32
    %66 = vector.broadcast %c-2048144789_i32_12 : i32 to vector<32x512xi32>
    %67 = arith.muli %65, %66 : vector<32x512xi32>
    %c13_i32_13 = arith.constant 13 : i32
    %68 = vector.broadcast %c13_i32_13 : i32 to vector<32x512xi32>
    %69 = arith.shrui %67, %68 : vector<32x512xi32>
    %70 = arith.xori %67, %69 : vector<32x512xi32>
    %c-1028477387_i32_14 = arith.constant -1028477387 : i32
    %71 = vector.broadcast %c-1028477387_i32_14 : i32 to vector<32x512xi32>
    %72 = arith.muli %70, %71 : vector<32x512xi32>
    %c16_i32_15 = arith.constant 16 : i32
    %73 = vector.broadcast %c16_i32_15 : i32 to vector<32x512xi32>
    %74 = arith.shrui %72, %73 : vector<32x512xi32>
    %75 = arith.xori %72, %74 : vector<32x512xi32>
    %c16711935_i32_16 = arith.constant 16711935 : i32
    %76 = vector.broadcast %c16711935_i32_16 : i32 to vector<32x512xi32>
    %77 = arith.andi %75, %76 : vector<32x512xi32>
    %78 = arith.addi %59, %77 : vector<32x512xi32>
    %c8_i32_17 = arith.constant 8 : i32
    %79 = vector.broadcast %c8_i32_17 : i32 to vector<32x512xi32>
    %80 = arith.shrui %75, %79 : vector<32x512xi32>
    %c16711935_i32_18 = arith.constant 16711935 : i32
    %81 = vector.broadcast %c16711935_i32_18 : i32 to vector<32x512xi32>
    %82 = arith.andi %80, %81 : vector<32x512xi32>
    %83 = arith.addi %78, %82 : vector<32x512xi32>
    %c65535_i32 = arith.constant 65535 : i32
    %84 = vector.broadcast %c65535_i32 : i32 to vector<32x512xi32>
    %85 = arith.andi %83, %84 : vector<32x512xi32>
    %c16_i32_19 = arith.constant 16 : i32
    %86 = vector.broadcast %c16_i32_19 : i32 to vector<32x512xi32>
    %87 = arith.shrui %83, %86 : vector<32x512xi32>
    %88 = arith.addi %85, %87 : vector<32x512xi32>
    %89 = arith.sitofp %88 : vector<32x512xi32> to vector<32x512xf32>
    %90 = vector.broadcast %1 : f32 to vector<32x512xf32>
    %91 = arith.mulf %89, %90 : vector<32x512xf32>
    %92 = vector.broadcast %2 : f32 to vector<32x512xf32>
    %93 = arith.subf %91, %92 : vector<32x512xf32>
    %c0_20 = arith.constant 0 : index
    %c0_21 = arith.constant 0 : index
    %94 = vector.load %arg3[%c0_20, %c0_21] : memref<32x512xi8, #tpu.memory_space<vmem>>, vector<32x512xi8>
    %95 = arith.uitofp %94 : vector<32x512xi8> to vector<32x512xf32>
    %96 = arith.addf %95, %93 : vector<32x512xf32>
    %cst = arith.constant 0.000000e+00 : f32
    %cst_22 = arith.constant 2.550000e+02 : f32
    %97 = vector.broadcast %cst : f32 to vector<32x512xf32>
    %98 = arith.maximumf %97, %96 : vector<32x512xf32>
    %99 = vector.broadcast %cst_22 : f32 to vector<32x512xf32>
    %100 = arith.minimumf %99, %98 : vector<32x512xf32>
    %101 = arith.fptoui %100 : vector<32x512xf32> to vector<32x512xi8>
    %c0_23 = arith.constant 0 : index
    %c0_24 = arith.constant 0 : index
    %102 = vector.load %arg4[%c0_23, %c0_24] : memref<32x512xi8, #tpu.memory_space<vmem>>, vector<32x512xi8>
    tpu.vector_store %arg4[%c0_23, %c0_24], %101 {strides = array<i32>} : memref<32x512xi8, #tpu.memory_space<vmem>>, vector<32x512xi8>,
    return
  }
  func.func @transform_0(%arg0: i32) -> i32 {
    %c0_i32 = arith.constant 0 : i32
    %c0_i32_0 = arith.constant 0 : i32
    return %c0_i32 : i32
  }
  func.func @transform_1(%arg0: i32) -> i32 {
    %c0_i32 = arith.constant 0 : i32
    %c0_i32_0 = arith.constant 0 : i32
    return %c0_i32 : i32
  }
  func.func @transform_2(%arg0: i32) -> (i32, i32) {
    %c0_i32 = arith.constant 0 : i32
    %c0_i32_0 = arith.constant 0 : i32
    return %arg0, %c0_i32 : i32, i32
  }
  func.func @transform_3(%arg0: i32) -> (i32, i32) {
    %c0_i32 = arith.constant 0 : i32
    %c0_i32_0 = arith.constant 0 : i32
    return %arg0, %c0_i32 : i32, i32
  }
}

</mosaic_0001>

<llo_original>
// kernel: _run_noise_kernel.1
$region0: #{_run_noise_kernel.1}
  #allocation0 [shape = 'u32[]', space=smem, size = 0x4, offset = 0x4, fixed_abs, tag = 'smem constant byte address 0x4 - core index']
  #allocation1 [shape = 'u32[144,128]{1,0:T(1,128)}', space=vmem, size = 0x12000, scoped, tag = 'internal scratch']
  #allocation2 [shape = 's32[1]{0:T(128)S(6)}', space=smem, size = 0x200, scoped, tag = 'scoped memory for _run_noise_kernel.1']
  %s0 = inlined_call_operand.<no memory space> [shape: s32[1], index: 0, kind: input, shape index: {}]
  %s1 = inlined_call_operand.vmem [shape: f32[2], index: 1, kind: input, shape index: {}]
  %s2 = inlined_call_operand.hbm [shape: u8[32,512], index: 2, kind: input, shape index: {}]
  %s3 = inlined_call_operand.hbm [shape: u8[32,512], index: 3, kind: output, shape index: {}]
  %s4 = sld [smem:[#allocation0]]
  $region30: #{_run_noise_kernel.1} parent=0
    _
  %s6 = ssub.s32 1, %s4
  %s7 = scalar_select 0, %s6, %s4
  %8 = sst [smem:[#allocation2]] %s0
  $region1: #{_run_noise_kernel.1} parent=0
    #allocation3 [shape = 'u8[512]{0}', space=smem, size = 0x200, scoped, tag = 'input window, operand 1, single buffered']
    #allocation4 [shape = 's32[1]{0}', space=sflag, size = 0x4, scoped, tag = 'scoped memory for _run_noise_kernel.1']
    #allocation5 [shape = 's32[1]{0}', space=sflag, size = 0x4, scoped, tag = 'scoped memory for _run_noise_kernel.1']
    #allocation6 [shape = 's32[1]{0}', space=sflag, size = 0x4, scoped, tag = 'scoped memory for _run_noise_kernel.1']
    #allocation7 [shape = 'u8[16384]{0}', space=vmem, size = 0x4000, scoped, tag = 'input window, operand 2, single buffered']
    #allocation8 [shape = 'u8[16384]{0}', space=vmem, size = 0x4000, scoped, tag = 'output window, operand 0, single buffered']
    %9 = vsyncpa [#allocation6], 0
    %10 = vsyncpa [#allocation4], 0
    %11 = vsyncpa [#allocation5], 0
    // Predicated region
    $region2: #{_run_noise_kernel.1} parent=1 // pred_check
      _
    $region3: #{_run_noise_kernel.1} parent=1 // pred_check_branch
      %13 = sbr.rel (0) target = $region5
    $region4: #{_run_noise_kernel.1} parent=1 // pred_region
      _
    $region5: #{_run_noise_kernel.1} parent=1 // pred_fallthru
      _
    // Predicated region
    $region6: #{_run_noise_kernel.1} parent=1 // pred_check
      _
    $region7: #{_run_noise_kernel.1} parent=1 // pred_check_branch
      %15 = sbr.rel (0) target = $region9
    $region8: #{_run_noise_kernel.1} parent=1 // pred_region
      %s17 = ssub.s32 16, 16
      %18 = vsyncadd [#allocation6], %s17
      %s20 = sshll.u32 %s1, 4
      %s21 = int_to_ptr.vmem [resolvable:$true] %s20
      %23 = dma.vmem_to_smem %s21, 16, [#allocation3], [#allocation6]
    $region9: #{_run_noise_kernel.1} parent=1 // pred_fallthru
      _
    // Predicated region
    $region10: #{_run_noise_kernel.1} parent=1 // pred_check
      _
    $region11: #{_run_noise_kernel.1} parent=1 // pred_check_branch
      %25 = sbr.rel (0) target = $region13
    $region12: #{_run_noise_kernel.1} parent=1 // pred_region
      %s27 = ssub.s32 512, 512
      %28 = vsyncadd [#allocation4], %s27
      %s30 = sshll.u32 [#allocation7], 4
      %s31 = int_to_ptr.vmem [resolvable:$true] %s30
      %33 = dma.hbm_to_vmem [thread:$0]  %s2, 512, %s31, [#allocation4]
    $region13: #{_run_noise_kernel.1} parent=1 // pred_fallthru
      _
    // Predicated region
    $region14: #{_run_noise_kernel.1} parent=1 // pred_check
      _
    $region15: #{_run_noise_kernel.1} parent=1 // pred_check_branch
      %35 = sbr.rel (0) target = $region17
    $region16: #{_run_noise_kernel.1} parent=1 // pred_region
      %36 = dma.done [#allocation6], 16
    $region17: #{_run_noise_kernel.1} parent=1 // pred_fallthru
      _
    // Predicated region
    $region18: #{_run_noise_kernel.1} parent=1 // pred_check
      _
    $region19: #{_run_noise_kernel.1} parent=1 // pred_check_branch
      %38 = sbr.rel (0) target = $region21
    $region20: #{_run_noise_kernel.1} parent=1 // pred_region
      %39 = dma.done [#allocation4], 512
    $region21: #{_run_noise_kernel.1} parent=1 // pred_fallthru
      _
    %40 = sfence
    %s41 = sld [smem:[#allocation2]]
    %s42 = sld [smem:[#allocation3]]
    %s43 = sld [smem:[#allocation3 + $0x1]]
    %s44 = smul.u32 0, 16384
    %v45 = vlaneseq
    %v46 = vshrl.u32 %v45, 7
    %v47 = vadd.s32 %v46, 8
    %v48 = vadd.s32 %v46, 16
    %v49 = vadd.s32 %v46, 24
    %v50 = vlaneseq
    %v51 = vand.u32 %v50, 127
    %v52 = vadd.s32 %v51, 128
    %v53 = vadd.s32 %v51, 256
    %v54 = vadd.s32 %v51, 384
    %v55 = vmul.u32 %v46, 512
    %v56 = vmul.u32 %v47, 512
    %v57 = vmul.u32 %v48, 512
    %v58 = vmul.u32 %v49, 512
    %v59 = vstv %s44
    %v60 = vadd.s32 %v59, %v55
    %v61 = vadd.s32 %v59, %v56
    %v62 = vadd.s32 %v59, %v57
    %v63 = vadd.s32 %v59, %v58
    %v64 = vadd.s32 %v60, %v51
    %v65 = vadd.s32 %v60, %v52
    %v66 = vadd.s32 %v60, %v53
    %v67 = vadd.s32 %v60, %v54
    %v68 = vadd.s32 %v61, %v51
    %v69 = vadd.s32 %v61, %v52
    %v70 = vadd.s32 %v61, %v53
    %v71 = vadd.s32 %v61, %v54
    %v72 = vadd.s32 %v62, %v51
    %v73 = vadd.s32 %v62, %v52
    %v74 = vadd.s32 %v62, %v53
    %v75 = vadd.s32 %v62, %v54
    %v76 = vadd.s32 %v63, %v51
    %v77 = vadd.s32 %v63, %v52
    %v78 = vadd.s32 %v63, %v53
    %v79 = vadd.s32 %v63, %v54
    %s80 = sadd.s32 %s41, 1779033703
    %v81 = vstv %s80
    %v82 = vxor.u32 %v64, %v81
    %v83 = vxor.u32 %v65, %v81
    %v84 = vxor.u32 %v66, %v81
    %v85 = vxor.u32 %v67, %v81
    %v86 = vxor.u32 %v68, %v81
    %v87 = vxor.u32 %v69, %v81
    %v88 = vxor.u32 %v70, %v81
    %v89 = vxor.u32 %v71, %v81
    %v90 = vxor.u32 %v72, %v81
    %v91 = vxor.u32 %v73, %v81
    %v92 = vxor.u32 %v74, %v81
    %v93 = vxor.u32 %v75, %v81
    %v94 = vxor.u32 %v76, %v81
    %v95 = vxor.u32 %v77, %v81
    %v96 = vxor.u32 %v78, %v81
    %v97 = vxor.u32 %v79, %v81
    %v98 = vshrl.u32 %v82, 16
    %v99 = vshrl.u32 %v83, 16
    %v100 = vshrl.u32 %v84, 16
    %v101 = vshrl.u32 %v85, 16
    %v102 = vshrl.u32 %v86, 16
    %v103 = vshrl.u32 %v87, 16
    %v104 = vshrl.u32 %v88, 16
    %v105 = vshrl.u32 %v89, 16
    %v106 = vshrl.u32 %v90, 16
    %v107 = vshrl.u32 %v91, 16
    %v108 = vshrl.u32 %v92, 16
    %v109 = vshrl.u32 %v93, 16
    %v110 = vshrl.u32 %v94, 16
    %v111 = vshrl.u32 %v95, 16
    %v112 = vshrl.u32 %v96, 16
    %v113 = vshrl.u32 %v97, 16
    %v114 = vxor.u32 %v82, %v98
    %v115 = vxor.u32 %v83, %v99
    %v116 = vxor.u32 %v84, %v100
    %v117 = vxor.u32 %v85, %v101
    %v118 = vxor.u32 %v86, %v102
    %v119 = vxor.u32 %v87, %v103
    %v120 = vxor.u32 %v88, %v104
    %v121 = vxor.u32 %v89, %v105
    %v122 = vxor.u32 %v90, %v106
    %v123 = vxor.u32 %v91, %v107
    %v124 = vxor.u32 %v92, %v108
    %v125 = vxor.u32 %v93, %v109
    %v126 = vxor.u32 %v94, %v110
    %v127 = vxor.u32 %v95, %v111
    %v128 = vxor.u32 %v96, %v112
    %v129 = vxor.u32 %v97, %v113
    %v130 = vmul.u32 %v114, 2246822507
    %v131 = vmul.u32 %v115, 2246822507
    %v132 = vmul.u32 %v116, 2246822507
    %v133 = vmul.u32 %v117, 2246822507
    %v134 = vmul.u32 %v118, 2246822507
    %v135 = vmul.u32 %v119, 2246822507
    %v136 = vmul.u32 %v120, 2246822507
    %v137 = vmul.u32 %v121, 2246822507
    %v138 = vmul.u32 %v122, 2246822507
    %v139 = vmul.u32 %v123, 2246822507
    %v140 = vmul.u32 %v124, 2246822507
    %v141 = vmul.u32 %v125, 2246822507
    %v142 = vmul.u32 %v126, 2246822507
    %v143 = vmul.u32 %v127, 2246822507
    %v144 = vmul.u32 %v128, 2246822507
    %v145 = vmul.u32 %v129, 2246822507
    %v146 = vshrl.u32 %v130, 13
    %v147 = vshrl.u32 %v131, 13
    %v148 = vshrl.u32 %v132, 13
    %v149 = vshrl.u32 %v133, 13
    %v150 = vshrl.u32 %v134, 13
    %v151 = vshrl.u32 %v135, 13
    %v152 = vshrl.u32 %v136, 13
    %v153 = vshrl.u32 %v137, 13
    %v154 = vshrl.u32 %v138, 13
    %v155 = vshrl.u32 %v139, 13
    %v156 = vshrl.u32 %v140, 13
    %v157 = vshrl.u32 %v141, 13
    %v158 = vshrl.u32 %v142, 13
    %v159 = vshrl.u32 %v143, 13
    %v160 = vshrl.u32 %v144, 13
    %v161 = vshrl.u32 %v145, 13
    %v162 = vxor.u32 %v130, %v146
    %v163 = vxor.u32 %v131, %v147
    %v164 = vxor.u32 %v132, %v148
    %v165 = vxor.u32 %v133, %v149
    %v166 = vxor.u32 %v134, %v150
    %v167 = vxor.u32 %v135, %v151
    %v168 = vxor.u32 %v136, %v152
    %v169 = vxor.u32 %v137, %v153
    %v170 = vxor.u32 %v138, %v154
    %v171 = vxor.u32 %v139, %v155
    %v172 = vxor.u32 %v140, %v156
    %v173 = vxor.u32 %v141, %v157
    %v174 = vxor.u32 %v142, %v158
    %v175 = vxor.u32 %v143, %v159
    %v176 = vxor.u32 %v144, %v160
    %v177 = vxor.u32 %v145, %v161
    %v178 = vmul.u32 %v162, 3266489909
    %v179 = vmul.u32 %v163, 3266489909
    %v180 = vmul.u32 %v164, 3266489909
    %v181 = vmul.u32 %v165, 3266489909
    %v182 = vmul.u32 %v166, 3266489909
    %v183 = vmul.u32 %v167, 3266489909
    %v184 = vmul.u32 %v168, 3266489909
    %v185 = vmul.u32 %v169, 3266489909
    %v186 = vmul.u32 %v170, 3266489909
    %v187 = vmul.u32 %v171, 3266489909
    %v188 = vmul.u32 %v172, 3266489909
    %v189 = vmul.u32 %v173, 3266489909
    %v190 = vmul.u32 %v174, 3266489909
    %v191 = vmul.u32 %v175, 3266489909
    %v192 = vmul.u32 %v176, 3266489909
    %v193 = vmul.u32 %v177, 3266489909
    %v194 = vshrl.u32 %v178, 16
    %v195 = vshrl.u32 %v179, 16
    %v196 = vshrl.u32 %v180, 16
    %v197 = vshrl.u32 %v181, 16
    %v198 = vshrl.u32 %v182, 16
    %v199 = vshrl.u32 %v183, 16
    %v200 = vshrl.u32 %v184, 16
    %v201 = vshrl.u32 %v185, 16
    %v202 = vshrl.u32 %v186, 16
    %v203 = vshrl.u32 %v187, 16
    %v204 = vshrl.u32 %v188, 16
    %v205 = vshrl.u32 %v189, 16
    %v206 = vshrl.u32 %v190, 16
    %v207 = vshrl.u32 %v191, 16
    %v208 = vshrl.u32 %v192, 16
    %v209 = vshrl.u32 %v193, 16
    %v210 = vxor.u32 %v178, %v194
    %v211 = vxor.u32 %v179, %v195
    %v212 = vxor.u32 %v180, %v196
    %v213 = vxor.u32 %v181, %v197
    %v214 = vxor.u32 %v182, %v198
    %v215 = vxor.u32 %v183, %v199
    %v216 = vxor.u32 %v184, %v200
    %v217 = vxor.u32 %v185, %v201
    %v218 = vxor.u32 %v186, %v202
    %v219 = vxor.u32 %v187, %v203
    %v220 = vxor.u32 %v188, %v204
    %v221 = vxor.u32 %v189, %v205
    %v222 = vxor.u32 %v190, %v206
    %v223 = vxor.u32 %v191, %v207
    %v224 = vxor.u32 %v192, %v208
    %v225 = vxor.u32 %v193, %v209
    %v226 = vand.u32 %v210, 16711935
    %v227 = vand.u32 %v211, 16711935
    %v228 = vand.u32 %v212, 16711935
    %v229 = vand.u32 %v213, 16711935
    %v230 = vand.u32 %v214, 16711935
    %v231 = vand.u32 %v215, 16711935
    %v232 = vand.u32 %v216, 16711935
    %v233 = vand.u32 %v217, 16711935
    %v234 = vand.u32 %v218, 16711935
    %v235 = vand.u32 %v219, 16711935
    %v236 = vand.u32 %v220, 16711935
    %v237 = vand.u32 %v221, 16711935
    %v238 = vand.u32 %v222, 16711935
    %v239 = vand.u32 %v223, 16711935
    %v240 = vand.u32 %v224, 16711935
    %v241 = vand.u32 %v225, 16711935
    %v242 = vshrl.u32 %v210, 8
    %v243 = vshrl.u32 %v211, 8
    %v244 = vshrl.u32 %v212, 8
    %v245 = vshrl.u32 %v213, 8
    %v246 = vshrl.u32 %v214, 8
    %v247 = vshrl.u32 %v215, 8
    %v248 = vshrl.u32 %v216, 8
    %v249 = vshrl.u32 %v217, 8
    %v250 = vshrl.u32 %v218, 8
    %v251 = vshrl.u32 %v219, 8
    %v252 = vshrl.u32 %v220, 8
    %v253 = vshrl.u32 %v221, 8
    %v254 = vshrl.u32 %v222, 8
    %v255 = vshrl.u32 %v223, 8
    %v256 = vshrl.u32 %v224, 8
    %v257 = vshrl.u32 %v225, 8
    %v258 = vand.u32 %v242, 16711935
    %v259 = vand.u32 %v243, 16711935
    %v260 = vand.u32 %v244, 16711935
    %v261 = vand.u32 %v245, 16711935
    %v262 = vand.u32 %v246, 16711935
    %v263 = vand.u32 %v247, 16711935
    %v264 = vand.u32 %v248, 16711935
    %v265 = vand.u32 %v249, 16711935
    %v266 = vand.u32 %v250, 16711935
    %v267 = vand.u32 %v251, 16711935
    %v268 = vand.u32 %v252, 16711935
    %v269 = vand.u32 %v253, 16711935
    %v270 = vand.u32 %v254, 16711935
    %v271 = vand.u32 %v255, 16711935
    %v272 = vand.u32 %v256, 16711935
    %v273 = vand.u32 %v257, 16711935
    %v274 = vadd.s32 %v226, %v258
    %v275 = vadd.s32 %v227, %v259
    %v276 = vadd.s32 %v228, %v260
    %v277 = vadd.s32 %v229, %v261
    %v278 = vadd.s32 %v230, %v262
    %v279 = vadd.s32 %v231, %v263
    %v280 = vadd.s32 %v232, %v264
    %v281 = vadd.s32 %v233, %v265
    %v282 = vadd.s32 %v234, %v266
    %v283 = vadd.s32 %v235, %v267
    %v284 = vadd.s32 %v236, %v268
    %v285 = vadd.s32 %v237, %v269
    %v286 = vadd.s32 %v238, %v270
    %v287 = vadd.s32 %v239, %v271
    %v288 = vadd.s32 %v240, %v272
    %v289 = vadd.s32 %v241, %v273
    %s290 = sadd.s32 %s41, 138502176
    %v291 = vstv %s290
    %v292 = vxor.u32 %v64, %v291
    %v293 = vxor.u32 %v65, %v291
    %v294 = vxor.u32 %v66, %v291
    %v295 = vxor.u32 %v67, %v291
    %v296 = vxor.u32 %v68, %v291
    %v297 = vxor.u32 %v69, %v291
    %v298 = vxor.u32 %v70, %v291
    %v299 = vxor.u32 %v71, %v291
    %v300 = vxor.u32 %v72, %v291
    %v301 = vxor.u32 %v73, %v291
    %v302 = vxor.u32 %v74, %v291
    %v303 = vxor.u32 %v75, %v291
    %v304 = vxor.u32 %v76, %v291
    %v305 = vxor.u32 %v77, %v291
    %v306 = vxor.u32 %v78, %v291
    %v307 = vxor.u32 %v79, %v291
    %v308 = vshrl.u32 %v292, 16
    %v309 = vshrl.u32 %v293, 16
    %v310 = vshrl.u32 %v294, 16
    %v311 = vshrl.u32 %v295, 16
    %v312 = vshrl.u32 %v296, 16
    %v313 = vshrl.u32 %v297, 16
    %v314 = vshrl.u32 %v298, 16
    %v315 = vshrl.u32 %v299, 16
    %v316 = vshrl.u32 %v300, 16
    %v317 = vshrl.u32 %v301, 16
    %v318 = vshrl.u32 %v302, 16
    %v319 = vshrl.u32 %v303, 16
    %v320 = vshrl.u32 %v304, 16
    %v321 = vshrl.u32 %v305, 16
    %v322 = vshrl.u32 %v306, 16
    %v323 = vshrl.u32 %v307, 16
    %v324 = vxor.u32 %v292, %v308
    %v325 = vxor.u32 %v293, %v309
    %v326 = vxor.u32 %v294, %v310
    %v327 = vxor.u32 %v295, %v311
    %v328 = vxor.u32 %v296, %v312
    %v329 = vxor.u32 %v297, %v313
    %v330 = vxor.u32 %v298, %v314
    %v331 = vxor.u32 %v299, %v315
    %v332 = vxor.u32 %v300, %v316
    %v333 = vxor.u32 %v301, %v317
    %v334 = vxor.u32 %v302, %v318
    %v335 = vxor.u32 %v303, %v319
    %v336 = vxor.u32 %v304, %v320
    %v337 = vxor.u32 %v305, %v321
    %v338 = vxor.u32 %v306, %v322
    %v339 = vxor.u32 %v307, %v323
    %v340 = vmul.u32 %v324, 2246822507
    %v341 = vmul.u32 %v325, 2246822507
    %v342 = vmul.u32 %v326, 2246822507
    %v343 = vmul.u32 %v327, 2246822507
    %v344 = vmul.u32 %v328, 2246822507
    %v345 = vmul.u32 %v329, 2246822507
    %v346 = vmul.u32 %v330, 2246822507
    %v347 = vmul.u32 %v331, 2246822507
    %v348 = vmul.u32 %v332, 2246822507
    %v349 = vmul.u32 %v333, 2246822507
    %v350 = vmul.u32 %v334, 2246822507
    %v351 = vmul.u32 %v335, 2246822507
    %v352 = vmul.u32 %v336, 2246822507
    %v353 = vmul.u32 %v337, 2246822507
    %v354 = vmul.u32 %v338, 2246822507
    %v355 = vmul.u32 %v339, 2246822507
    %v356 = vshrl.u32 %v340, 13
    %v357 = vshrl.u32 %v341, 13
    %v358 = vshrl.u32 %v342, 13
    %v359 = vshrl.u32 %v343, 13
    %v360 = vshrl.u32 %v344, 13
    %v361 = vshrl.u32 %v345, 13
    %v362 = vshrl.u32 %v346, 13
    %v363 = vshrl.u32 %v347, 13
    %v364 = vshrl.u32 %v348, 13
    %v365 = vshrl.u32 %v349, 13
    %v366 = vshrl.u32 %v350, 13
    %v367 = vshrl.u32 %v351, 13
    %v368 = vshrl.u32 %v352, 13
    %v369 = vshrl.u32 %v353, 13
    %v370 = vshrl.u32 %v354, 13
    %v371 = vshrl.u32 %v355, 13
    %v372 = vxor.u32 %v340, %v356
    %v373 = vxor.u32 %v341, %v357
    %v374 = vxor.u32 %v342, %v358
    %v375 = vxor.u32 %v343, %v359
    %v376 = vxor.u32 %v344, %v360
    %v377 = vxor.u32 %v345, %v361
    %v378 = vxor.u32 %v346, %v362
    %v379 = vxor.u32 %v347, %v363
    %v380 = vxor.u32 %v348, %v364
    %v381 = vxor.u32 %v349, %v365
    %v382 = vxor.u32 %v350, %v366
    %v383 = vxor.u32 %v351, %v367
    %v384 = vxor.u32 %v352, %v368
    %v385 = vxor.u32 %v353, %v369
    %v386 = vxor.u32 %v354, %v370
    %v387 = vxor.u32 %v355, %v371
    %v388 = vmul.u32 %v372, 3266489909
    %v389 = vmul.u32 %v373, 3266489909
    %v390 = vmul.u32 %v374, 3266489909
    %v391 = vmul.u32 %v375, 3266489909
    %v392 = vmul.u32 %v376, 3266489909
    %v393 = vmul.u32 %v377, 3266489909
    %v394 = vmul.u32 %v378, 3266489909
    %v395 = vmul.u32 %v379, 3266489909
    %v396 = vmul.u32 %v380, 3266489909
    %v397 = vmul.u32 %v381, 3266489909
    %v398 = vmul.u32 %v382, 3266489909
    %v399 = vmul.u32 %v383, 3266489909
    %v400 = vmul.u32 %v384, 3266489909
    %v401 = vmul.u32 %v385, 3266489909
    %v402 = vmul.u32 %v386, 3266489909
    %v403 = vmul.u32 %v387, 3266489909
    %v404 = vshrl.u32 %v388, 16
    %v405 = vshrl.u32 %v389, 16
    %v406 = vshrl.u32 %v390, 16
    %v407 = vshrl.u32 %v391, 16
    %v408 = vshrl.u32 %v392, 16
    %v409 = vshrl.u32 %v393, 16
    %v410 = vshrl.u32 %v394, 16
    %v411 = vshrl.u32 %v395, 16
    %v412 = vshrl.u32 %v396, 16
    %v413 = vshrl.u32 %v397, 16
    %v414 = vshrl.u32 %v398, 16
    %v415 = vshrl.u32 %v399, 16
    %v416 = vshrl.u32 %v400, 16
    %v417 = vshrl.u32 %v401, 16
    %v418 = vshrl.u32 %v402, 16
    %v419 = vshrl.u32 %v403, 16
    %v420 = vxor.u32 %v388, %v404
    %v421 = vxor.u32 %v389, %v405
    %v422 = vxor.u32 %v390, %v406
    %v423 = vxor.u32 %v391, %v407
    %v424 = vxor.u32 %v392, %v408
    %v425 = vxor.u32 %v393, %v409
    %v426 = vxor.u32 %v394, %v410
    %v427 = vxor.u32 %v395, %v411
    %v428 = vxor.u32 %v396, %v412
    %v429 = vxor.u32 %v397, %v413
    %v430 = vxor.u32 %v398, %v414
    %v431 = vxor.u32 %v399, %v415
    %v432 = vxor.u32 %v400, %v416
    %v433 = vxor.u32 %v401, %v417
    %v434 = vxor.u32 %v402, %v418
    %v435 = vxor.u32 %v403, %v419
    %v436 = vand.u32 %v420, 16711935
    %v437 = vand.u32 %v421, 16711935
    %v438 = vand.u32 %v422, 16711935
    %v439 = vand.u32 %v423, 16711935
    %v440 = vand.u32 %v424, 16711935
    %v441 = vand.u32 %v425, 16711935
    %v442 = vand.u32 %v426, 16711935
    %v443 = vand.u32 %v427, 16711935
    %v444 = vand.u32 %v428, 16711935
    %v445 = vand.u32 %v429, 16711935
    %v446 = vand.u32 %v430, 16711935
    %v447 = vand.u32 %v431, 16711935
    %v448 = vand.u32 %v432, 16711935
    %v449 = vand.u32 %v433, 16711935
    %v450 = vand.u32 %v434, 16711935
    %v451 = vand.u32 %v435, 16711935
    %v452 = vadd.s32 %v274, %v436
    %v453 = vadd.s32 %v275, %v437
    %v454 = vadd.s32 %v276, %v438
    %v455 = vadd.s32 %v277, %v439
    %v456 = vadd.s32 %v278, %v440
    %v457 = vadd.s32 %v279, %v441
    %v458 = vadd.s32 %v280, %v442
    %v459 = vadd.s32 %v281, %v443
    %v460 = vadd.s32 %v282, %v444
    %v461 = vadd.s32 %v283, %v445
    %v462 = vadd.s32 %v284, %v446
    %v463 = vadd.s32 %v285, %v447
    %v464 = vadd.s32 %v286, %v448
    %v465 = vadd.s32 %v287, %v449
    %v466 = vadd.s32 %v288, %v450
    %v467 = vadd.s32 %v289, %v451
    %v468 = vshrl.u32 %v420, 8
    %v469 = vshrl.u32 %v421, 8
    %v470 = vshrl.u32 %v422, 8
    %v471 = vshrl.u32 %v423, 8
    %v472 = vshrl.u32 %v424, 8
    %v473 = vshrl.u32 %v425, 8
    %v474 = vshrl.u32 %v426, 8
    %v475 = vshrl.u32 %v427, 8
    %v476 = vshrl.u32 %v428, 8
    %v477 = vshrl.u32 %v429, 8
    %v478 = vshrl.u32 %v430, 8
    %v479 = vshrl.u32 %v431, 8
    %v480 = vshrl.u32 %v432, 8
    %v481 = vshrl.u32 %v433, 8
    %v482 = vshrl.u32 %v434, 8
    %v483 = vshrl.u32 %v435, 8
    %v484 = vand.u32 %v468, 16711935
    %v485 = vand.u32 %v469, 16711935
    %v486 = vand.u32 %v470, 16711935
    %v487 = vand.u32 %v471, 16711935
    %v488 = vand.u32 %v472, 16711935
    %v489 = vand.u32 %v473, 16711935
    %v490 = vand.u32 %v474, 16711935
    %v491 = vand.u32 %v475, 16711935
    %v492 = vand.u32 %v476, 16711935
    %v493 = vand.u32 %v477, 16711935
    %v494 = vand.u32 %v478, 16711935
    %v495 = vand.u32 %v479, 16711935
    %v496 = vand.u32 %v480, 16711935
    %v497 = vand.u32 %v481, 16711935
    %v498 = vand.u32 %v482, 16711935
    %v499 = vand.u32 %v483, 16711935
    %v500 = vadd.s32 %v452, %v484
    %v501 = vadd.s32 %v453, %v485
    %v502 = vadd.s32 %v454, %v486
    %v503 = vadd.s32 %v455, %v487
    %v504 = vadd.s32 %v456, %v488
    %v505 = vadd.s32 %v457, %v489
    %v506 = vadd.s32 %v458, %v490
    %v507 = vadd.s32 %v459, %v491
    %v508 = vadd.s32 %v460, %v492
    %v509 = vadd.s32 %v461, %v493
    %v510 = vadd.s32 %v462, %v494
    %v511 = vadd.s32 %v463, %v495
    %v512 = vadd.s32 %v464, %v496
    %v513 = vadd.s32 %v465, %v497
    %v514 = vadd.s32 %v466, %v498
    %v515 = vadd.s32 %v467, %v499
    %s516 = sadd.s32 %s41, 2792937945
    %v517 = vstv %s516
    %v518 = vxor.u32 %v64, %v517
    %v519 = vxor.u32 %v65, %v517
    %v520 = vxor.u32 %v66, %v517
    %v521 = vxor.u32 %v67, %v517
    %v522 = vxor.u32 %v68, %v517
    %v523 = vxor.u32 %v69, %v517
    %v524 = vxor.u32 %v70, %v517
    %v525 = vxor.u32 %v71, %v517
    %v526 = vxor.u32 %v72, %v517
    %v527 = vxor.u32 %v73, %v517
    %v528 = vxor.u32 %v74, %v517
    %v529 = vxor.u32 %v75, %v517
    %v530 = vxor.u32 %v76, %v517
    %v531 = vxor.u32 %v77, %v517
    %v532 = vxor.u32 %v78, %v517
    %v533 = vxor.u32 %v79, %v517
    %v534 = vshrl.u32 %v518, 16
    %v535 = vshrl.u32 %v519, 16
    %v536 = vshrl.u32 %v520, 16
    %v537 = vshrl.u32 %v521, 16
    %v538 = vshrl.u32 %v522, 16
    %v539 = vshrl.u32 %v523, 16
    %v540 = vshrl.u32 %v524, 16
    %v541 = vshrl.u32 %v525, 16
    %v542 = vshrl.u32 %v526, 16
    %v543 = vshrl.u32 %v527, 16
    %v544 = vshrl.u32 %v528, 16
    %v545 = vshrl.u32 %v529, 16
    %v546 = vshrl.u32 %v530, 16
    %v547 = vshrl.u32 %v531, 16
    %v548 = vshrl.u32 %v532, 16
    %v549 = vshrl.u32 %v533, 16
    %v550 = vxor.u32 %v518, %v534
    %v551 = vxor.u32 %v519, %v535
    %v552 = vxor.u32 %v520, %v536
    %v553 = vxor.u32 %v521, %v537
    %v554 = vxor.u32 %v522, %v538
    %v555 = vxor.u32 %v523, %v539
    %v556 = vxor.u32 %v524, %v540
    %v557 = vxor.u32 %v525, %v541
    %v558 = vxor.u32 %v526, %v542
    %v559 = vxor.u32 %v527, %v543
    %v560 = vxor.u32 %v528, %v544
    %v561 = vxor.u32 %v529, %v545
    %v562 = vxor.u32 %v530, %v546
    %v563 = vxor.u32 %v531, %v547
    %v564 = vxor.u32 %v532, %v548
    %v565 = vxor.u32 %v533, %v549
    %v566 = vmul.u32 %v550, 2246822507
    %v567 = vmul.u32 %v551, 2246822507
    %v568 = vmul.u32 %v552, 2246822507
    %v569 = vmul.u32 %v553, 2246822507
    %v570 = vmul.u32 %v554, 2246822507
    %v571 = vmul.u32 %v555, 2246822507
    %v572 = vmul.u32 %v556, 2246822507
    %v573 = vmul.u32 %v557, 2246822507
    %v574 = vmul.u32 %v558, 2246822507
    %v575 = vmul.u32 %v559, 2246822507
    %v576 = vmul.u32 %v560, 2246822507
    %v577 = vmul.u32 %v561, 2246822507
    %v578 = vmul.u32 %v562, 2246822507
    %v579 = vmul.u32 %v563, 2246822507
    %v580 = vmul.u32 %v564, 2246822507
    %v581 = vmul.u32 %v565, 2246822507
    %v582 = vshrl.u32 %v566, 13
    %v583 = vshrl.u32 %v567, 13
    %v584 = vshrl.u32 %v568, 13
    %v585 = vshrl.u32 %v569, 13
    %v586 = vshrl.u32 %v570, 13
    %v587 = vshrl.u32 %v571, 13
    %v588 = vshrl.u32 %v572, 13
    %v589 = vshrl.u32 %v573, 13
    %v590 = vshrl.u32 %v574, 13
    %v591 = vshrl.u32 %v575, 13
    %v592 = vshrl.u32 %v576, 13
    %v593 = vshrl.u32 %v577, 13
    %v594 = vshrl.u32 %v578, 13
    %v595 = vshrl.u32 %v579, 13
    %v596 = vshrl.u32 %v580, 13
    %v597 = vshrl.u32 %v581, 13
    %v598 = vxor.u32 %v566, %v582
    %v599 = vxor.u32 %v567, %v583
    %v600 = vxor.u32 %v568, %v584
    %v601 = vxor.u32 %v569, %v585
    %v602 = vxor.u32 %v570, %v586
    %v603 = vxor.u32 %v571, %v587
    %v604 = vxor.u32 %v572, %v588
    %v605 = vxor.u32 %v573, %v589
    %v606 = vxor.u32 %v574, %v590
    %v607 = vxor.u32 %v575, %v591
    %v608 = vxor.u32 %v576, %v592
    %v609 = vxor.u32 %v577, %v593
    %v610 = vxor.u32 %v578, %v594
    %v611 = vxor.u32 %v579, %v595
    %v612 = vxor.u32 %v580, %v596
    %v613 = vxor.u32 %v581, %v597
    %v614 = vmul.u32 %v598, 3266489909
    %v615 = vmul.u32 %v599, 3266489909
    %v616 = vmul.u32 %v600, 3266489909
    %v617 = vmul.u32 %v601, 3266489909
    %v618 = vmul.u32 %v602, 3266489909
    %v619 = vmul.u32 %v603, 3266489909
    %v620 = vmul.u32 %v604, 3266489909
    %v621 = vmul.u32 %v605, 3266489909
    %v622 = vmul.u32 %v606, 3266489909
    %v623 = vmul.u32 %v607, 3266489909
    %v624 = vmul.u32 %v608, 3266489909
    %v625 = vmul.u32 %v609, 3266489909
    %v626 = vmul.u32 %v610, 3266489909
    %v627 = vmul.u32 %v611, 3266489909
    %v628 = vmul.u32 %v612, 3266489909
    %v629 = vmul.u32 %v613, 3266489909
    %v630 = vshrl.u32 %v614, 16
    %v631 = vshrl.u32 %v615, 16
    %v632 = vshrl.u32 %v616, 16
    %v633 = vshrl.u32 %v617, 16
    %v634 = vshrl.u32 %v618, 16
    %v635 = vshrl.u32 %v619, 16
    %v636 = vshrl.u32 %v620, 16
    %v637 = vshrl.u32 %v621, 16
    %v638 = vshrl.u32 %v622, 16
    %v639 = vshrl.u32 %v623, 16
    %v640 = vshrl.u32 %v624, 16
    %v641 = vshrl.u32 %v625, 16
    %v642 = vshrl.u32 %v626, 16
    %v643 = vshrl.u32 %v627, 16
    %v644 = vshrl.u32 %v628, 16
    %v645 = vshrl.u32 %v629, 16
    %v646 = vxor.u32 %v614, %v630
    %v647 = vxor.u32 %v615, %v631
    %v648 = vxor.u32 %v616, %v632
    %v649 = vxor.u32 %v617, %v633
    %v650 = vxor.u32 %v618, %v634
    %v651 = vxor.u32 %v619, %v635
    %v652 = vxor.u32 %v620, %v636
    %v653 = vxor.u32 %v621, %v637
    %v654 = vxor.u32 %v622, %v638
    %v655 = vxor.u32 %v623, %v639
    %v656 = vxor.u32 %v624, %v640
    %v657 = vxor.u32 %v625, %v641
    %v658 = vxor.u32 %v626, %v642
    %v659 = vxor.u32 %v627, %v643
    %v660 = vxor.u32 %v628, %v644
    %v661 = vxor.u32 %v629, %v645
    %v662 = vand.u32 %v646, 16711935
    %v663 = vand.u32 %v647, 16711935
    %v664 = vand.u32 %v648, 16711935
    %v665 = vand.u32 %v649, 16711935
    %v666 = vand.u32 %v650, 16711935
    %v667 = vand.u32 %v651, 16711935
    %v668 = vand.u32 %v652, 16711935
    %v669 = vand.u32 %v653, 16711935
    %v670 = vand.u32 %v654, 16711935
    %v671 = vand.u32 %v655, 16711935
    %v672 = vand.u32 %v656, 16711935
    %v673 = vand.u32 %v657, 16711935
    %v674 = vand.u32 %v658, 16711935
    %v675 = vand.u32 %v659, 16711935
    %v676 = vand.u32 %v660, 16711935
    %v677 = vand.u32 %v661, 16711935
    %v678 = vadd.s32 %v500, %v662
    %v679 = vadd.s32 %v501, %v663
    %v680 = vadd.s32 %v502, %v664
    %v681 = vadd.s32 %v503, %v665
    %v682 = vadd.s32 %v504, %v666
    %v683 = vadd.s32 %v505, %v667
    %v684 = vadd.s32 %v506, %v668
    %v685 = vadd.s32 %v507, %v669
    %v686 = vadd.s32 %v508, %v670
    %v687 = vadd.s32 %v509, %v671
    %v688 = vadd.s32 %v510, %v672
    %v689 = vadd.s32 %v511, %v673
    %v690 = vadd.s32 %v512, %v674
    %v691 = vadd.s32 %v513, %v675
    %v692 = vadd.s32 %v514, %v676
    %v693 = vadd.s32 %v515, %v677
    %v694 = vshrl.u32 %v646, 8
    %v695 = vshrl.u32 %v647, 8
    %v696 = vshrl.u32 %v648, 8
    %v697 = vshrl.u32 %v649, 8
    %v698 = vshrl.u32 %v650, 8
    %v699 = vshrl.u32 %v651, 8
    %v700 = vshrl.u32 %v652, 8
    %v701 = vshrl.u32 %v653, 8
    %v702 = vshrl.u32 %v654, 8
    %v703 = vshrl.u32 %v655, 8
    %v704 = vshrl.u32 %v656, 8
    %v705 = vshrl.u32 %v657, 8
    %v706 = vshrl.u32 %v658, 8
    %v707 = vshrl.u32 %v659, 8
    %v708 = vshrl.u32 %v660, 8
    %v709 = vshrl.u32 %v661, 8
    %v710 = vand.u32 %v694, 16711935
    %v711 = vand.u32 %v695, 16711935
    %v712 = vand.u32 %v696, 16711935
    %v713 = vand.u32 %v697, 16711935
    %v714 = vand.u32 %v698, 16711935
    %v715 = vand.u32 %v699, 16711935
    %v716 = vand.u32 %v700, 16711935
    %v717 = vand.u32 %v701, 16711935
    %v718 = vand.u32 %v702, 16711935
    %v719 = vand.u32 %v703, 16711935
    %v720 = vand.u32 %v704, 16711935
    %v721 = vand.u32 %v705, 16711935
    %v722 = vand.u32 %v706, 16711935
    %v723 = vand.u32 %v707, 16711935
    %v724 = vand.u32 %v708, 16711935
    %v725 = vand.u32 %v709, 16711935
    %v726 = vadd.s32 %v678, %v710
    %v727 = vadd.s32 %v679, %v711
    %v728 = vadd.s32 %v680, %v712
    %v729 = vadd.s32 %v681, %v713
    %v730 = vadd.s32 %v682, %v714
    %v731 = vadd.s32 %v683, %v715
    %v732 = vadd.s32 %v684, %v716
    %v733 = vadd.s32 %v685, %v717
    %v734 = vadd.s32 %v686, %v718
    %v735 = vadd.s32 %v687, %v719
    %v736 = vadd.s32 %v688, %v720
    %v737 = vadd.s32 %v689, %v721
    %v738 = vadd.s32 %v690, %v722
    %v739 = vadd.s32 %v691, %v723
    %v740 = vadd.s32 %v692, %v724
    %v741 = vadd.s32 %v693, %v725
    %v742 = vand.u32 %v726, 65535
    %v743 = vand.u32 %v727, 65535
    %v744 = vand.u32 %v728, 65535
    %v745 = vand.u32 %v729, 65535
    %v746 = vand.u32 %v730, 65535
    %v747 = vand.u32 %v731, 65535
    %v748 = vand.u32 %v732, 65535
    %v749 = vand.u32 %v733, 65535
    %v750 = vand.u32 %v734, 65535
    %v751 = vand.u32 %v735, 65535
    %v752 = vand.u32 %v736, 65535
    %v753 = vand.u32 %v737, 65535
    %v754 = vand.u32 %v738, 65535
    %v755 = vand.u32 %v739, 65535
    %v756 = vand.u32 %v740, 65535
    %v757 = vand.u32 %v741, 65535
    %v758 = vshrl.u32 %v726, 16
    %v759 = vshrl.u32 %v727, 16
    %v760 = vshrl.u32 %v728, 16
    %v761 = vshrl.u32 %v729, 16
    %v762 = vshrl.u32 %v730, 16
    %v763 = vshrl.u32 %v731, 16
    %v764 = vshrl.u32 %v732, 16
    %v765 = vshrl.u32 %v733, 16
    %v766 = vshrl.u32 %v734, 16
    %v767 = vshrl.u32 %v735, 16
    %v768 = vshrl.u32 %v736, 16
    %v769 = vshrl.u32 %v737, 16
    %v770 = vshrl.u32 %v738, 16
    %v771 = vshrl.u32 %v739, 16
    %v772 = vshrl.u32 %v740, 16
    %v773 = vshrl.u32 %v741, 16
    %v774 = vadd.s32 %v742, %v758
    %v775 = vadd.s32 %v743, %v759
    %v776 = vadd.s32 %v744, %v760
    %v777 = vadd.s32 %v745, %v761
    %v778 = vadd.s32 %v746, %v762
    %v779 = vadd.s32 %v747, %v763
    %v780 = vadd.s32 %v748, %v764
    %v781 = vadd.s32 %v749, %v765
    %v782 = vadd.s32 %v750, %v766
    %v783 = vadd.s32 %v751, %v767
    %v784 = vadd.s32 %v752, %v768
    %v785 = vadd.s32 %v753, %v769
    %v786 = vadd.s32 %v754, %v770
    %v787 = vadd.s32 %v755, %v771
    %v788 = vadd.s32 %v756, %v772
    %v789 = vadd.s32 %v757, %v773
    %v790 = vcvt.s32.f32 %v774
    %v791 = vcvt.s32.f32 %v775
    %v792 = vcvt.s32.f32 %v776
    %v793 = vcvt.s32.f32 %v777
    %v794 = vcvt.s32.f32 %v778
    %v795 = vcvt.s32.f32 %v779
    %v796 = vcvt.s32.f32 %v780
    %v797 = vcvt.s32.f32 %v781
    %v798 = vcvt.s32.f32 %v782
    %v799 = vcvt.s32.f32 %v783
    %v800 = vcvt.s32.f32 %v784
    %v801 = vcvt.s32.f32 %v785
    %v802 = vcvt.s32.f32 %v786
    %v803 = vcvt.s32.f32 %v787
    %v804 = vcvt.s32.f32 %v788
    %v805 = vcvt.s32.f32 %v789
    %v806 = vstv %s42
    %v807 = vmul.f32 %v790, %v806
    %v808 = vmul.f32 %v791, %v806
    %v809 = vmul.f32 %v792, %v806
    %v810 = vmul.f32 %v793, %v806
    %v811 = vmul.f32 %v794, %v806
    %v812 = vmul.f32 %v795, %v806
    %v813 = vmul.f32 %v796, %v806
    %v814 = vmul.f32 %v797, %v806
    %v815 = vmul.f32 %v798, %v806
    %v816 = vmul.f32 %v799, %v806
    %v817 = vmul.f32 %v800, %v806
    %v818 = vmul.f32 %v801, %v806
    %v819 = vmul.f32 %v802, %v806
    %v820 = vmul.f32 %v803, %v806
    %v821 = vmul.f32 %v804, %v806
    %v822 = vmul.f32 %v805, %v806
    %v823 = vstv %s43
    %v824 = vsub.f32 %v807, %v823
    %v825 = vsub.f32 %v808, %v823
    %v826 = vsub.f32 %v809, %v823
    %v827 = vsub.f32 %v810, %v823
    %v828 = vsub.f32 %v811, %v823
    %v829 = vsub.f32 %v812, %v823
    %v830 = vsub.f32 %v813, %v823
    %v831 = vsub.f32 %v814, %v823
    %v832 = vsub.f32 %v815, %v823
    %v833 = vsub.f32 %v816, %v823
    %v834 = vsub.f32 %v817, %v823
    %v835 = vsub.f32 %v818, %v823
    %v836 = vsub.f32 %v819, %v823
    %v837 = vsub.f32 %v820, %v823
    %v838 = vsub.f32 %v821, %v823
    %v839 = vsub.f32 %v822, %v823
    %v840 = vld [vmem:[#allocation7] sm:$0xff]
    %v841 = vld [vmem:[#allocation7 + $0x8] sm:$0xff]
    %v842 = vld [vmem:[#allocation7 + $0x10] sm:$0xff]
    %v843 = vld [vmem:[#allocation7 + $0x18] sm:$0xff]
    %v844 = vunpack.c.0.s8 %v840
    %v845 = vunpack.c.0.s8 %v841
    %v846 = vunpack.c.0.s8 %v842
    %v847 = vunpack.c.0.s8 %v843
    %v848 = vunpack.c.1.s8 %v840
    %v849 = vunpack.c.1.s8 %v841
    %v850 = vunpack.c.1.s8 %v842
    %v851 = vunpack.c.1.s8 %v843
    %v852 = vunpack.c.2.s8 %v840
    %v853 = vunpack.c.2.s8 %v841
    %v854 = vunpack.c.2.s8 %v842
    %v855 = vunpack.c.2.s8 %v843
    %v856 = vunpack.c.3.s8 %v840
    %v857 = vunpack.c.3.s8 %v841
    %v858 = vunpack.c.3.s8 %v842
    %v859 = vunpack.c.3.s8 %v843
    %v860 = vand.u32 %v844, 255
    %v861 = vand.u32 %v845, 255
    %v862 = vand.u32 %v846, 255
    %v863 = vand.u32 %v847, 255
    %v864 = vand.u32 %v848, 255
    %v865 = vand.u32 %v849, 255
    %v866 = vand.u32 %v850, 255
    %v867 = vand.u32 %v851, 255
    %v868 = vand.u32 %v852, 255
    %v869 = vand.u32 %v853, 255
    %v870 = vand.u32 %v854, 255
    %v871 = vand.u32 %v855, 255
    %v872 = vand.u32 %v856, 255
    %v873 = vand.u32 %v857, 255
    %v874 = vand.u32 %v858, 255
    %v875 = vand.u32 %v859, 255
    %v876 = vcvt.s32.f32 %v860
    %v877 = vcvt.s32.f32 %v861
    %v878 = vcvt.s32.f32 %v862
    %v879 = vcvt.s32.f32 %v863
    %v880 = vcvt.s32.f32 %v864
    %v881 = vcvt.s32.f32 %v865
    %v882 = vcvt.s32.f32 %v866
    %v883 = vcvt.s32.f32 %v867
    %v884 = vcvt.s32.f32 %v868
    %v885 = vcvt.s32.f32 %v869
    %v886 = vcvt.s32.f32 %v870
    %v887 = vcvt.s32.f32 %v871
    %v888 = vcvt.s32.f32 %v872
    %v889 = vcvt.s32.f32 %v873
    %v890 = vcvt.s32.f32 %v874
    %v891 = vcvt.s32.f32 %v875
    %v892 = vadd.f32 %v876, %v824
    %v893 = vadd.f32 %v877, %v825
    %v894 = vadd.f32 %v878, %v826
    %v895 = vadd.f32 %v879, %v827
    %v896 = vadd.f32 %v880, %v828
    %v897 = vadd.f32 %v881, %v829
    %v898 = vadd.f32 %v882, %v830
    %v899 = vadd.f32 %v883, %v831
    %v900 = vadd.f32 %v884, %v832
    %v901 = vadd.f32 %v885, %v833
    %v902 = vadd.f32 %v886, %v834
    %v903 = vadd.f32 %v887, %v835
    %v904 = vadd.f32 %v888, %v836
    %v905 = vadd.f32 %v889, %v837
    %v906 = vadd.f32 %v890, %v838
    %v907 = vadd.f32 %v891, %v839
    %v908 = vmax.f32 %v892, 0.0
    %v909 = vmax.f32 %v893, 0.0
    %v910 = vmax.f32 %v894, 0.0
    %v911 = vmax.f32 %v895, 0.0
    %v912 = vmax.f32 %v896, 0.0
    %v913 = vmax.f32 %v897, 0.0
    %v914 = vmax.f32 %v898, 0.0
    %v915 = vmax.f32 %v899, 0.0
    %v916 = vmax.f32 %v900, 0.0
    %v917 = vmax.f32 %v901, 0.0
    %v918 = vmax.f32 %v902, 0.0
    %v919 = vmax.f32 %v903, 0.0
    %v920 = vmax.f32 %v904, 0.0
    %v921 = vmax.f32 %v905, 0.0
    %v922 = vmax.f32 %v906, 0.0
    %v923 = vmax.f32 %v907, 0.0
    %v924 = vmin.f32 %v908, 255.0
    %v925 = vmin.f32 %v909, 255.0
    %v926 = vmin.f32 %v910, 255.0
    %v927 = vmin.f32 %v911, 255.0
    %v928 = vmin.f32 %v912, 255.0
    %v929 = vmin.f32 %v913, 255.0
    %v930 = vmin.f32 %v914, 255.0
    %v931 = vmin.f32 %v915, 255.0
    %v932 = vmin.f32 %v916, 255.0
    %v933 = vmin.f32 %v917, 255.0
    %v934 = vmin.f32 %v918, 255.0
    %v935 = vmin.f32 %v919, 255.0
    %v936 = vmin.f32 %v920, 255.0
    %v937 = vmin.f32 %v921, 255.0
    %v938 = vmin.f32 %v922, 255.0
    %v939 = vmin.f32 %v923, 255.0
    %v940 = vtrunc.f32 %v924
    %v941 = vtrunc.f32 %v925
    %v942 = vtrunc.f32 %v926
    %v943 = vtrunc.f32 %v927
    %v944 = vtrunc.f32 %v928
    %v945 = vtrunc.f32 %v929
    %v946 = vtrunc.f32 %v930
    %v947 = vtrunc.f32 %v931
    %v948 = vtrunc.f32 %v932
    %v949 = vtrunc.f32 %v933
    %v950 = vtrunc.f32 %v934
    %v951 = vtrunc.f32 %v935
    %v952 = vtrunc.f32 %v936
    %v953 = vtrunc.f32 %v937
    %v954 = vtrunc.f32 %v938
    %v955 = vtrunc.f32 %v939
    %v956 = vpack.c.f32.eXmY %v940, %v944, 56
    %v960 = vpack.c.f32.eXmY %v948, %v952, 56
    %v964 = vpack.c.b8 %v960, %v956
    %v966 = vpack.c.f32.eXmY %v941, %v945, 56
    %v970 = vpack.c.f32.eXmY %v949, %v953, 56
    %v974 = vpack.c.b8 %v970, %v966
    %v976 = vpack.c.f32.eXmY %v942, %v946, 56
    %v980 = vpack.c.f32.eXmY %v950, %v954, 56
    %v984 = vpack.c.b8 %v980, %v976
    %v986 = vpack.c.f32.eXmY %v943, %v947, 56
    %v990 = vpack.c.f32.eXmY %v951, %v955, 56
    %v994 = vpack.c.b8 %v990, %v986
    %996 = vst [vmem:[#allocation8] sm:$0xff] %v964
    %997 = vst [vmem:[#allocation8 + $0x8] sm:$0xff] %v974
    %998 = vst [vmem:[#allocation8 + $0x10] sm:$0xff] %v984
    %999 = vst [vmem:[#allocation8 + $0x18] sm:$0xff] %v994
    // Predicated region
    $region22: #{_run_noise_kernel.1} parent=1 // pred_check
      _
    $region23: #{_run_noise_kernel.1} parent=1 // pred_check_branch
      %1001 = sbr.rel (0) target = $region25
    $region24: #{_run_noise_kernel.1} parent=1 // pred_region
      %s1003 = ssub.s32 512, 512
      %1004 = vsyncadd [#allocation5], %s1003
      %s1006 = sshll.u32 [#allocation8], 4
      %s1007 = int_to_ptr.vmem [resolvable:$true] %s1006
      %1009 = dma.vmem_to_hbm [thread:$0]  %s1007, 512, %s3, [#allocation5]
    $region25: #{_run_noise_kernel.1} parent=1 // pred_fallthru
      _
    // Predicated region
    $region26: #{_run_noise_kernel.1} parent=1 // pred_check
      _
    $region27: #{_run_noise_kernel.1} parent=1 // pred_check_branch
      %1011 = sbr.rel (0) target = $region29
    $region28: #{_run_noise_kernel.1} parent=1 // pred_region
      %1012 = dma.done [#allocation5], 512
    $region29: #{_run_noise_kernel.1} parent=1 // pred_fallthru
      _
    %1013 = vsyncpa [#allocation4], 1
    %1014 = vsyncpa [#allocation5], 1
    %1015 = vsyncpa [#allocation6], 1

</llo_original>
